<compile_context>
chip_gen: v7x
topology: tpu7x:2x2x1
jax: 0.10.0
libtpu: 0.0.40
codegen_flags: <defaults>
</compile_context>

<pallas_src>
import math
from functools import partial

import jax
import jax.numpy as jnp
from jax.experimental import pallas as pl
from jax.experimental.pallas import tpu as pltpu


# -----------------------------------------------------------------------------
# Kernel 1: fused Q/K/V input projections  y = x @ W^T + b
# (1/sqrt(d_k) is pre-folded into the W_q / b_q slot host-side)
# -----------------------------------------------------------------------------
def _proj_kernel(x_ref, w_ref, b_ref, out_ref):
    x = x_ref[0].astype(w_ref.dtype)                                    # (TR, D)
    y = jnp.dot(x, w_ref[0], preferred_element_type=jnp.float32) + b_ref[0]
    out_ref[0] = y.astype(out_ref.dtype)


# -----------------------------------------------------------------------------
# Kernel 2: grouped-head attention + folded W_o output projection.
# grid = (batch, q_blocks, head_groups); the f32 output block is resident across
# the innermost ("arbitrary") head-group axis -> standard accumulator pattern.
# -----------------------------------------------------------------------------
def _attn_kernel(q_ref, k_ref, v_ref, wo_ref, bo_ref, out_ref, attn_ref,
                 *, approx_recip):
    g = pl.program_id(2)

    q = q_ref[0]                                                        # (G, TQ, d_k)
    k = k_ref[0]                                                        # (G, S,  d_k)
    v = v_ref[0]                                                        # (G, S,  d_k)
    G = q.shape[0]

    # scores = q @ k^T per head (softmax scale already folded into W_q / b_q)
    scores = jnp.einsum("gqd,gkd->gqk", q, k,
                        preferred_element_type=jnp.float32)             # (G, TQ, S) f32

    # softmax in f32
    m = jnp.max(scores, axis=-1, keepdims=True)
    e = jnp.exp(scores - m)
    denom = jnp.sum(e, axis=-1, keepdims=True)
    if approx_recip:
        attn = e * pl.reciprocal(denom, approx=True)                    # EUP slot
    else:
        attn = e / denom                                                # exact (f32 path)
    attn_ref[0] = attn.astype(attn_ref.dtype)

    # per-head context
    ctx = jnp.einsum("gqk,gkd->gqd", attn.astype(v.dtype), v,
                     preferred_element_type=jnp.float32)                # (G, TQ, d_k) f32

    # init the resident output block with the W_o bias once per (b, qb)
    @pl.when(g == 0)
    def _():
        out_ref[0] = jnp.broadcast_to(bo_ref[...],
                                      out_ref.shape[1:]).astype(out_ref.dtype)

    # folded output projection, accumulated over head groups into the resident block
    ctx_c = ctx.astype(wo_ref.dtype)
    contrib = jnp.dot(ctx_c[0], wo_ref[0, 0], preferred_element_type=jnp.float32)
    for gg in range(1, G):
        contrib = contrib + jnp.dot(ctx_c[gg], wo_ref[0, gg],
                                    preferred_element_type=jnp.float32)
    out_ref[0] += contrib.astype(out_ref.dtype)


def _round_up(n, m):
    return ((n + m - 1) // m) * m


def multi_head_attention(Q, K, V, params, num_heads, *,
                         block_q=None, group_heads=None,
                         compute_dtype=jnp.bfloat16, attn_dtype=jnp.float32):
    """Q, K, V: [B, S, D] float32. Returns (output [B, S, D] f32, attn [B, H, S, S])."""
    B, S, D = Q.shape
    H = num_heads
    assert D % H == 0
    d_k = D // H
    scale = 1.0 / math.sqrt(d_k)

    cb = jnp.dtype(compute_dtype).itemsize
    ab = jnp.dtype(attn_dtype).itemsize
    f32 = jnp.float32

    # ---- generation-aware VMEM cap (≈48 MiB on v7x, ≈96 MiB on v5e/v6e) ----
    try:
        phys_vmem = int(pltpu.get_tpu_info().vmem_capacity_bytes)
    except Exception:
        phys_vmem = 64 << 20                     # conservative fallback (v7x size)
    vmem_cap = phys_vmem * 3 // 4

    # ---- head grouping: ~128 combined lanes per step when d_k < 128 ----
    if group_heads is None:
        group_heads = max(1, min(H, max(1, 128 // d_k)))
    G = max(1, min(int(group_heads), H))
    while H % G != 0:
        G -= 1
    HG = H // G

    # ---- q-block size (bigger tiles on 128-MiB-VMEM parts) ----
    if block_q is None:
        max_bq = 256 if phys_vmem <= (64 << 20) else 512
        if S <= max_bq:
            block_q = S
        else:
            block_q = next((c for c in (512, 256, 128) if c <= max_bq and S % c == 0), S)
    assert S % block_q == 0
    n_qb = S // block_q

    Dp = _round_up(D, 128)

    # =========================================================================
    # Stage 1: Q/K/V projections (hoisted out of the attention kernel).
    # =========================================================================
    BS = B * S
    x_stack = jnp.stack([Q, K, V]).reshape(3, BS, D)                    # f32
    w_stack = jnp.stack([params["wq"].T * scale,                        # scale folded in
                         params["wk"].T,
                         params["wv"].T]).astype(compute_dtype)         # (3, D, D)
    b_stack = jnp.stack([params["bq"] * scale,
                         params["bk"],
                         params["bv"]]).reshape(3, 1, D).astype(f32)    # (3, 1, D)

    tr = BS if BS <= 512 else next((c for c in (512, 256, 128) if BS % c == 0), BS)
    n_rb = BS // tr

    proj_vmem = 2 * (tr * Dp * 4 + D * Dp * cb + tr * Dp * cb + Dp * 4) + (4 << 20)
    proj_vmem = int(min(max(proj_vmem, 16 << 20), vmem_cap))

    proj = pl.pallas_call(
        _proj_kernel,
        out_shape=jax.ShapeDtypeStruct((3, BS, D), compute_dtype),
        grid_spec=pltpu.PrefetchScalarGridSpec(
            num_scalar_prefetch=0,
            grid=(3, n_rb),
            in_specs=[
                pl.BlockSpec((1, tr, D), lambda p, r: (p, r, 0)),       # x rows
                pl.BlockSpec((1, D, D),  lambda p, r: (p, 0, 0)),       # W^T
                pl.BlockSpec((1, 1, D),  lambda p, r: (p, 0, 0)),       # bias
            ],
            out_specs=pl.BlockSpec((1, tr, D), lambda p, r: (p, r, 0)),
        ),
        compiler_params=pltpu.CompilerParams(
            dimension_semantics=("arbitrary", "parallel"),
            vmem_limit_bytes=proj_vmem,
        ),
        cost_estimate=pl.CostEstimate(
            flops=2 * 3 * BS * D * D,
            transcendentals=0,
            bytes_accessed=3 * BS * D * (4 + cb) + 3 * D * D * cb,
        ),
    )(x_stack, w_stack, b_stack)

    # Layout plumbing (XLA): per-head layout (3, B, H, S, d_k), already compute_dtype.
    proj = jnp.transpose(proj.reshape(3, B, S, H, d_k), (0, 1, 3, 2, 4))
    qp, kp, vp = proj[0], proj[1], proj[2]

    # =========================================================================
    # Stage 2: grouped-head attention + folded W_o.
    # =========================================================================
    wo_g = params["wo"].T.reshape(HG, G, d_k, D).astype(compute_dtype)  # (HG, G, d_k, D)
    bo = params["bo"].reshape(1, D).astype(f32)                         # (1, D)

    # explicit VMEM budget (lane/sublane-padded, double-buffered pipeline blocks)
    dkp = _round_up(d_k, 128)
    Sp = _round_up(S, 128)
    tqp = _round_up(block_q, 8)
    per_buf = (G * tqp * dkp * cb                       # q block
               + 2 * G * _round_up(S, 8) * dkp * cb     # k, v blocks
               + G * _round_up(d_k, 8) * Dp * cb        # W_o group block
               + tqp * Dp * 4                           # f32 output block
               + G * tqp * Sp * ab)                     # attn block
    vmem_limit = int(min(max(2 * per_buf + 8 * Dp + (4 << 20), 16 << 20), vmem_cap))

    cost = pl.CostEstimate(
        flops=4 * B * H * S * S * d_k + 2 * B * S * D * D,
        transcendentals=B * H * S * S,
        bytes_accessed=(B * H * S * d_k * cb * (1 + 2 * n_qb)   # q once, k/v per q-block
                        + B * n_qb * H * d_k * D * cb           # streamed W_o
                        + B * S * D * 4                         # output
                        + B * H * S * S * ab),                  # attention weights
    )

    grid_spec = pltpu.PrefetchScalarGridSpec(
        num_scalar_prefetch=0,
        grid=(B, n_qb, HG),
        in_specs=[
            pl.BlockSpec((1, G, block_q, d_k), lambda b, qb, g: (b, g, qb, 0)),  # q heads
            pl.BlockSpec((1, G, S, d_k),       lambda b, qb, g: (b, g, 0, 0)),   # k heads
            pl.BlockSpec((1, G, S, d_k),       lambda b, qb, g: (b, g, 0, 0)),   # v heads
            pl.BlockSpec((1, G, d_k, D),       lambda b, qb, g: (g, 0, 0, 0)),   # W_o group
            pl.BlockSpec((1, D),               lambda b, qb, g: (0, 0)),         # b_o
        ],
        out_specs=(
            pl.BlockSpec((1, block_q, D),      lambda b, qb, g: (b, qb, 0)),     # output (acc over g)
            pl.BlockSpec((1, G, block_q, S),   lambda b, qb, g: (b, g, qb, 0)),  # attention weights
        ),
    )

    approx_recip = bool(jnp.dtype(compute_dtype) != jnp.dtype(jnp.float32))

    out, attn = pl.pallas_call(
        partial(_attn_kernel, approx_recip=approx_recip),
        out_shape=(
            jax.ShapeDtypeStruct((B, S, D), jnp.float32),
            jax.ShapeDtypeStruct((B, H, S, S), attn_dtype),
        ),
        grid_spec=grid_spec,
        compiler_params=pltpu.CompilerParams(
            # projection hoisted -> q-block axis has no sequential dependence
            dimension_semantics=("parallel", "parallel", "arbitrary"),
            vmem_limit_bytes=vmem_limit,
        ),
        cost_estimate=cost,
    )(qp, kp, vp, wo_g, bo)
    return out, attn


def _reference(Q, K, V, params, num_heads):
    """Pure-JAX (f32) replica of the torch forward for verification."""
    B, S, D = Q.shape
    d_k = D // num_heads

    def lin(x, w, b):
        return x @ w.T + b

    qp = lin(Q, params["wq"], params["bq"]).reshape(B, S, num_heads, d_k).transpose(0, 2, 1, 3)
    kp = lin(K, params["wk"], params["bk"]).reshape(B, S, num_heads, d_k).transpose(0, 2, 1, 3)
    vp = lin(V, params["wv"], params["bv"]).reshape(B, S, num_heads, d_k).transpose(0, 2, 1, 3)

    scores = jnp.einsum("bhqd,bhkd->bhqk", qp, kp) / math.sqrt(d_k)
    attn = jax.nn.softmax(scores, axis=-1)
    ctx = jnp.einsum("bhqk,bhkd->bhqd", attn, vp)
    ctx = ctx.transpose(0, 2, 1, 3).reshape(B, S, D)
    out = lin(ctx, params["wo"], params["bo"])
    return out, attn


if __name__ == "__main__":
    B, S, D, H = 2, 8, 32, 4  # batch, seq, d_model, num_heads (d_k = 8)

    key = jax.random.PRNGKey(0)
    keys = jax.random.split(key, 11)

    # Deterministic synthetic parameters (shapes match nn.Linear(d_model, d_model)).
    params = {
        "wq": jax.random.normal(keys[0], (D, D), jnp.float32) * 0.05,
        "wk": jax.random.normal(keys[1], (D, D), jnp.float32) * 0.05,
        "wv": jax.random.normal(keys[2], (D, D), jnp.float32) * 0.05,
        "wo": jax.random.normal(keys[3], (D, D), jnp.float32) * 0.05,
        "bq": jax.random.normal(keys[4], (D,), jnp.float32) * 0.05,
        "bk": jax.random.normal(keys[5], (D,), jnp.float32) * 0.05,
        "bv": jax.random.normal(keys[6], (D,), jnp.float32) * 0.05,
        "bo": jax.random.normal(keys[7], (D,), jnp.float32) * 0.05,
    }

    Q = jax.random.normal(keys[8], (B, S, D), jnp.float32)
    K = jax.random.normal(keys[9], (B, S, D), jnp.float32)
    V = jax.random.normal(keys[10], (B, S, D), jnp.float32)

    ref_out, ref_attn = _reference(Q, K, V, params, H)

    # Default path: bf16 matmul operands, f32 accumulation / softmax, approx reciprocal.
    out, attn = multi_head_attention(Q, K, V, params, H)
    out = jax.block_until_ready(out)
    attn = jax.block_until_ready(attn)
    assert out.shape == (B, S, D) and attn.shape == (B, H, S, S)
    assert jnp.allclose(out, ref_out, atol=1e-2, rtol=1e-2)
    assert jnp.allclose(attn, ref_attn, atol=1e-2, rtol=1e-2)

    # Full-f32 operand path (exact divide): tight correctness verification.
    out32, attn32 = multi_head_attention(Q, K, V, params, H, compute_dtype=jnp.float32)
    out32 = jax.block_until_ready(out32)
    attn32 = jax.block_until_ready(attn32)
    assert jnp.allclose(out32, ref_out, atol=2e-3, rtol=2e-3)
    assert jnp.allclose(attn32, ref_attn, atol=2e-3, rtol=2e-3)

    print("KERNEL_OK")
</pallas_src>

<mosaic_0001>
module attributes {stable_mosaic.version = 11 : i64} {
  func.func @_proj_kernel(%arg0: i32, %arg1: i32, %arg2: memref<1x16x32xf32, #tpu.memory_space<vmem>>, %arg3: memref<1x32x32xbf16, #tpu.memory_space<vmem>>, %arg4: memref<1x1x32xf32, #tpu.memory_space<vmem>>, %arg5: memref<1x16x32xbf16, #tpu.memory_space<vmem>>) attributes {dimension_semantics = [#tpu.dimension_semantics<arbitrary>, #tpu.dimension_semantics<parallel>], iteration_bounds = array<i64: 3, 1>, scalar_prefetch = 0 : i64, scratch_operands = 0 : i64, tpu.core_type = #tpu.core_type<tc>, window_params = [{transform_indices = @transform_0, window_bounds = array<i64: 1, 16, 32>}, {transform_indices = @transform_1, window_bounds = array<i64: 1, 32, 32>}, {transform_indices = @transform_2, window_bounds = array<i64: 1, 1, 32>}, {transform_indices = @transform_3, window_bounds = array<i64: 1, 16, 32>}]} {
    %c0 = arith.constant 0 : index
    %c0_0 = arith.constant 0 : index
    %c0_1 = arith.constant 0 : index
    %0 = vector.load %arg2[%c0, %c0_0, %c0_1] : memref<1x16x32xf32, #tpu.memory_space<vmem>>, vector<1x16x32xf32>
    %1 = vector.shape_cast %0 : vector<1x16x32xf32> to vector<16x32xf32>
    %2 = arith.truncf %1 : vector<16x32xf32> to vector<16x32xbf16>
    %c0_2 = arith.constant 0 : index
    %c0_3 = arith.constant 0 : index
    %c0_4 = arith.constant 0 : index
    %3 = vector.load %arg3[%c0_2, %c0_3, %c0_4] : memref<1x32x32xbf16, #tpu.memory_space<vmem>>, vector<1x32x32xbf16>
    %4 = vector.shape_cast %3 : vector<1x32x32xbf16> to vector<32x32xbf16>
    %cst = arith.constant dense<0.000000e+00> : vector<16x32xf32>
    %5 = tpu.matmul %2, %4, %cst {dimension_numbers = #tpu.dot_dimension_numbers<[1], [0], [0], [1], [0, 0, 1, 1], [], []>} : vector<16x32xbf16>, vector<32x32xbf16>, vector<16x32xf32> -> vector<16x32xf32>
    %c0_5 = arith.constant 0 : index
    %c0_6 = arith.constant 0 : index
    %c0_7 = arith.constant 0 : index
    %6 = vector.load %arg4[%c0_5, %c0_6, %c0_7] : memref<1x1x32xf32, #tpu.memory_space<vmem>>, vector<1x1x32xf32>
    %7 = vector.shape_cast %6 : vector<1x1x32xf32> to vector<1x32xf32>
    %8 = vector.broadcast %7 : vector<1x32xf32> to vector<16x32xf32>
    %9 = arith.addf %5, %8 : vector<16x32xf32>
    %10 = arith.truncf %9 : vector<16x32xf32> to vector<16x32xbf16>
    %c0_8 = arith.constant 0 : index
    %c0_9 = arith.constant 0 : index
    %c0_10 = arith.constant 0 : index
    %11 = vector.load %arg5[%c0_8, %c0_9, %c0_10] : memref<1x16x32xbf16, #tpu.memory_space<vmem>>, vector<1x16x32xbf16>
    %12 = vector.shape_cast %11 : vector<1x16x32xbf16> to vector<16x32xbf16>
    %13 = vector.shape_cast %10 : vector<16x32xbf16> to vector<1x16x32xbf16>
    tpu.vector_store %arg5[%c0_8, %c0_9, %c0_10], %13 {strides = array<i32>} : memref<1x16x32xbf16, #tpu.memory_space<vmem>>, vector<1x16x32xbf16>,
    return
  }
  func.func @transform_0(%arg0: i32, %arg1: i32) -> (i32, i32, i32) {
    %c0_i32 = arith.constant 0 : i32
    %c0_i32_0 = arith.constant 0 : i32
    return %arg0, %arg1, %c0_i32 : i32, i32, i32
  }
  func.func @transform_1(%arg0: i32, %arg1: i32) -> (i32, i32, i32) {
    %c0_i32 = arith.constant 0 : i32
    %c0_i32_0 = arith.constant 0 : i32
    %c0_i32_1 = arith.constant 0 : i32
    return %arg0, %c0_i32, %c0_i32_0 : i32, i32, i32
  }
  func.func @transform_2(%arg0: i32, %arg1: i32) -> (i32, i32, i32) {
    %c0_i32 = arith.constant 0 : i32
    %c0_i32_0 = arith.constant 0 : i32
    %c0_i32_1 = arith.constant 0 : i32
    return %arg0, %c0_i32, %c0_i32_0 : i32, i32, i32
  }
  func.func @transform_3(%arg0: i32, %arg1: i32) -> (i32, i32, i32) {
    %c0_i32 = arith.constant 0 : i32
    %c0_i32_0 = arith.constant 0 : i32
    return %arg0, %arg1, %c0_i32 : i32, i32, i32
  }
}

</mosaic_0001>

<llo_original>
// kernel: tpu_custom_call.1
$region0: #{tpu_custom_call.1}
  #allocation0 [shape = 'u32[]', space=smem, size = 0x4, offset = 0x4, fixed_abs, tag = 'smem constant byte address 0x4 - core index']
  #allocation1 [shape = 'u32[144,128]{1,0:T(1,128)}', space=vmem, size = 0x12000, scoped, tag = 'internal scratch']
  %s0 = inlined_call_operand.hbm [shape: f32[3,16,32], index: 0, kind: input, shape index: {}]
  %s1 = inlined_call_operand.hbm [shape: bf16[3,32,32], index: 1, kind: input, shape index: {}]
  %s2 = inlined_call_operand.vmem [shape: f32[3,1,32], index: 2, kind: input, shape index: {}]
  %s3 = inlined_call_operand.hbm [shape: bf16[3,16,32], index: 3, kind: output, shape index: {}]
  %s4 = sld [smem:[#allocation0]]
  $region53: #{tpu_custom_call.1} parent=0
    _
  %s6 = ssub.s32 1, %s4
  %s7 = scalar_select 0, %s6, %s4
  $region1: #{tpu_custom_call.1} parent=0
    #allocation2 [shape = 'u8[16384]{0}', space=vmem, size = 0x4000, scoped, tag = 'input window, operand 0']
    #allocation3 [shape = 's32[2]{0}', space=sflag, size = 0x8, scoped, tag = 'scoped memory for tpu_custom_call.1']
    #allocation4 [shape = 's32[2]{0}', space=sflag, size = 0x8, scoped, tag = 'scoped memory for tpu_custom_call.1']
    #allocation5 [shape = 'u8[16384]{0}', space=vmem, size = 0x4000, scoped, tag = 'input window, operand 1']
    #allocation6 [shape = 's32[2]{0}', space=sflag, size = 0x8, scoped, tag = 'scoped memory for tpu_custom_call.1']
    #allocation7 [shape = 'u8[8192]{0}', space=vmem, size = 0x2000, scoped, tag = 'output window, operand 0']
    %8 = vsyncpa [#allocation3], 0
    %s9 = scalar_lea.sflag [#allocation3], 1
    %10 = vsyncpa %s9, 0
    %11 = vsyncpa [#allocation6], 0
    %s12 = scalar_lea.sflag [#allocation6], 1
    %13 = vsyncpa %s12, 0
    %14 = vsyncpa [#allocation4], 0
    %s15 = scalar_lea.sflag [#allocation4], 1
    %16 = vsyncpa %s15, 0
    loop: start=0, step=1, limit=5
    $region2: #{tpu_custom_call.1} parent=1 // loop_pre_header
      _
    $region3: #{tpu_custom_call.1} parent=1 // loop_header
      %s18 = sphi 0, %s22
      %p19 = scmp.ge.s32.totalorder %s18, 5
      %s25 = sphi 0, %s37
      %s26 = sphi 0, %s33
      %s27 = sphi 0, %s25
      %s28 = sphi 0, %s26
      %s29 = sphi 0, %s27
      %s30 = sphi 0, %s28
      %s42 = sphi 0, %s44
      %s45 = sphi 0, %s42
      %s46 = sphi 0, %s45
      %s62 = sphi 0, %s46
      %s68 = sphi 0, %s70
      %s71 = sphi 0, %s68
      %s72 = sphi 0, %s71
      %s88 = sphi 0, %s72
      %s94 = sphi 0, %s96
      %s97 = sphi 0, %s94
      %s98 = sphi 0, %s97
      %s114 = sphi 0, %s98
      %s122 = sphi 0, %s124
      %s125 = sphi 0, %s122
      %s126 = sphi 0, %s125
      %s142 = sphi 0, %s126
    $region4: #{tpu_custom_call.1} parent=1 // loop_header_branch
      %21 = sbr.rel (%p19) target = $region8
    $region5: #{tpu_custom_call.1} parent=1 // loop_body
      %s23 = ssub.s32 %s18, 1
      %s24 = ssub.s32 %s18, 2
      %s31 = sadd.s32 1, %s26
      %p32 = scmp.ge.s32.totalorder %s31, 1
      %s33 = scalar_select %p32, 0, %s31
      %s34 = sadd.s32 1, %s25
      %s35 = scalar_select %p32, %s34, %s25
      %p36 = scmp.ge.s32.totalorder %s35, 3
      %s37 = scalar_select %p36, 0, %s35
      %s38 = ssub.s32 %s25, %s37
      %s39 = ssub.s32 %s26, %s33
      %s40 = sor.u32 %s38, %s39
      %p41 = scmp.eq.s32.totalorder %s40, 0
      %s43 = sadd.s32 %s42, 1
      %s44 = scalar_select %p41, %s42, %s43
      %p47 = pneg %p41
      %p48 = scmp.eq.s32.totalorder %s18, 2
      %p49 = por %p47, %p48
      %p50 = scmp.ne.s32.totalorder %s42, %s45
      %p51 = scmp.eq.s32.totalorder %s18, 0
      %p52 = por %p50, %p51
      %p53 = scmp.ne.s32.totalorder %s42, %s45
      %p54 = scmp.eq.s32.totalorder %s23, 2
      %p55 = por %p53, %p54
      %p56 = scmp.ne.s32.totalorder %s45, %s46
      %p57 = scmp.eq.s32.totalorder %s23, 0
      %p58 = por %p56, %p57
      %p59 = scmp.ne.s32.totalorder %s45, %s46
      %p60 = scmp.eq.s32.totalorder %s24, 2
      %p61 = por %p59, %p60
      %p63 = scmp.ne.s32.totalorder %s46, %s62
      %p64 = scmp.eq.s32.totalorder %s24, 0
      %p65 = por %p63, %p64
      %s66 = ssub.s32 %s25, %s37
      %p67 = scmp.eq.s32.totalorder %s66, 0
      %s69 = sadd.s32 %s68, 1
      %s70 = scalar_select %p67, %s68, %s69
      %p73 = pneg %p67
      %p74 = scmp.eq.s32.totalorder %s18, 2
      %p75 = por %p73, %p74
      %p76 = scmp.ne.s32.totalorder %s68, %s71
      %p77 = scmp.eq.s32.totalorder %s18, 0
      %p78 = por %p76, %p77
      %p79 = scmp.ne.s32.totalorder %s68, %s71
      %p80 = scmp.eq.s32.totalorder %s23, 2
      %p81 = por %p79, %p80
      %p82 = scmp.ne.s32.totalorder %s71, %s72
      %p83 = scmp.eq.s32.totalorder %s23, 0
      %p84 = por %p82, %p83
      %p85 = scmp.ne.s32.totalorder %s71, %s72
      %p86 = scmp.eq.s32.totalorder %s24, 2
      %p87 = por %p85, %p86
      %p89 = scmp.ne.s32.totalorder %s72, %s88
      %p90 = scmp.eq.s32.totalorder %s24, 0
      %p91 = por %p89, %p90
      %s92 = ssub.s32 %s25, %s37
      %p93 = scmp.eq.s32.totalorder %s92, 0
      %s95 = sadd.s32 %s94, 1
      %s96 = scalar_select %p93, %s94, %s95
      %p99 = pneg %p93
      %p100 = scmp.eq.s32.totalorder %s18, 2
      %p101 = por %p99, %p100
      %p102 = scmp.ne.s32.totalorder %s94, %s97
      %p103 = scmp.eq.s32.totalorder %s18, 0
      %p104 = por %p102, %p103
      %p105 = scmp.ne.s32.totalorder %s94, %s97
      %p106 = scmp.eq.s32.totalorder %s23, 2
      %p107 = por %p105, %p106
      %p108 = scmp.ne.s32.totalorder %s97, %s98
      %p109 = scmp.eq.s32.totalorder %s23, 0
      %p110 = por %p108, %p109
      %p111 = scmp.ne.s32.totalorder %s97, %s98
      %p112 = scmp.eq.s32.totalorder %s24, 2
      %p113 = por %p111, %p112
      %p115 = scmp.ne.s32.totalorder %s98, %s114
      %p116 = scmp.eq.s32.totalorder %s24, 0
      %p117 = por %p115, %p116
      %s118 = ssub.s32 %s25, %s37
      %s119 = ssub.s32 %s26, %s33
      %s120 = sor.u32 %s118, %s119
      %p121 = scmp.eq.s32.totalorder %s120, 0
      %s123 = sadd.s32 %s122, 1
      %s124 = scalar_select %p121, %s122, %s123
      %p127 = pneg %p121
      %p128 = scmp.eq.s32.totalorder %s18, 2
      %p129 = por %p127, %p128
      %p130 = scmp.ne.s32.totalorder %s122, %s125
      %p131 = scmp.eq.s32.totalorder %s18, 0
      %p132 = por %p130, %p131
      %p133 = scmp.ne.s32.totalorder %s122, %s125
      %p134 = scmp.eq.s32.totalorder %s23, 2
      %p135 = por %p133, %p134
      %p136 = scmp.ne.s32.totalorder %s125, %s126
      %p137 = scmp.eq.s32.totalorder %s23, 0
      %p138 = por %p136, %p137
      %p139 = scmp.ne.s32.totalorder %s125, %s126
      %p140 = scmp.eq.s32.totalorder %s24, 2
      %p141 = por %p139, %p140
      %p143 = scmp.ne.s32.totalorder %s126, %s142
      %p144 = scmp.eq.s32.totalorder %s24, 0
      %p145 = por %p143, %p144
      %p146 = scmp.le.s32.totalorder 1, %s18
      %p147 = scmp.lt.s32.totalorder %s18, 4
      %p148 = pnand %p146, %p147
      %p149 = pneg %p148
      // Predicated region
      $region9: #{tpu_custom_call.1} parent=5 // pred_check
        _
      $region10: #{tpu_custom_call.1} parent=5 // pred_check_branch
        %151 = sbr.rel (%p148) target = $region12
      $region11: #{tpu_custom_call.1} parent=5 // pred_region
        %s152 = ssub.s32 %s18, 1
      $region12: #{tpu_custom_call.1} parent=5 // pred_fallthru
        _
      %p153 = scmp.lt.s32.totalorder %s18, 3
      // Predicated region
      $region13: #{tpu_custom_call.1} parent=5 // pred_check
        %p154 = pneg %p153
      $region14: #{tpu_custom_call.1} parent=5 // pred_check_branch
        %156 = sbr.rel (%p154) target = $region16
      $region15: #{tpu_custom_call.1} parent=5 // pred_region
        // Predicated region
        $region17: #{tpu_custom_call.1} parent=15 // pred_check
          %p157 = pneg %p52
        $region18: #{tpu_custom_call.1} parent=15 // pred_check_branch
          %159 = sbr.rel (%p157) target = $region20
        $region19: #{tpu_custom_call.1} parent=15 // pred_region
          %s160 = sand.u32 %s42, 1
          %s161 = scalar_lea.sflag [#allocation3], %s160
          %s162 = sand.u32 %s42, 1
          %s163 = smul.addr %s162, 16
          %s164 = scalar_lea.vmem [#allocation2], %s163
          %s165 = smul.u32 2, %s26
          %s167 = ssub.s32 256, 256
          %168 = vsyncadd %s161, %s167
          %s169 = smul.addr %s25, 2
          %s170 = sadd.s32 %s165, %s169
          %s171 = smul.addr %s170, 128
          %s172 = scalar_lea.hbm %s0, %s171
          %s173 = sshll.u32 %s164, 4
          %s174 = int_to_ptr.vmem [resolvable:$true] %s173
          %179 = dma.hbm_to_vmem [thread:$0]  %s172, 256, %s174, %s161, 128, 128, 8
        $region20: #{tpu_custom_call.1} parent=15 // pred_fallthru
          _
        // Predicated region
        $region21: #{tpu_custom_call.1} parent=15 // pred_check
          %p180 = pneg %p78
        $region22: #{tpu_custom_call.1} parent=15 // pred_check_branch
          %182 = sbr.rel (%p180) target = $region24
        $region23: #{tpu_custom_call.1} parent=15 // pred_region
          %s183 = sand.u32 %s68, 1
          %s184 = scalar_lea.sflag [#allocation6], %s183
          %s185 = sand.u32 %s68, 1
          %s186 = smul.addr %s185, 16
          %s187 = scalar_lea.vmem [#allocation5], %s186
          %s189 = ssub.s32 256, 256
          %190 = vsyncadd %s184, %s189
          %s191 = smul.addr %s25, 4
          %s192 = smul.addr %s191, 64
          %s193 = scalar_lea.hbm %s1, %s192
          %s194 = sshll.u32 %s187, 4
          %s195 = int_to_ptr.vmem [resolvable:$true] %s194
          %200 = dma.hbm_to_vmem [thread:$0]  %s193, 256, %s195, %s184, 64, 64, 4
        $region24: #{tpu_custom_call.1} parent=15 // pred_fallthru
          _
        // Predicated region
        $region25: #{tpu_custom_call.1} parent=15 // pred_check
          %p201 = pneg %p104
        $region26: #{tpu_custom_call.1} parent=15 // pred_check_branch
          %203 = sbr.rel (%p201) target = $region28
        $region27: #{tpu_custom_call.1} parent=15 // pred_region
          %p204 = scmp.lt.s32.totalorder %s25, 2
          %s205 = scalar_select %p204, %s25, 2
          %s206 = scalar_lea.vmem %s2, %s205
        $region28: #{tpu_custom_call.1} parent=15 // pred_fallthru
          _
      $region16: #{tpu_custom_call.1} parent=5 // pred_fallthru
        _
      %p207 = scmp.le.s32.totalorder 1, %s18
      %p208 = scmp.lt.s32.totalorder %s18, 4
      %p209 = pnand %p207, %p208
      %p210 = pneg %p209
      // Predicated region
      $region29: #{tpu_custom_call.1} parent=5 // pred_check
        _
      $region30: #{tpu_custom_call.1} parent=5 // pred_check_branch
        %212 = sbr.rel (%p209) target = $region32
      $region31: #{tpu_custom_call.1} parent=5 // pred_region
        %s213 = ssub.s32 %s18, 1
        %s214 = sand.u32 %s45, 1
        %s215 = scalar_lea.sflag [#allocation3], %s214
        %s216 = sand.u32 %s45, 1
        %s217 = smul.addr %s216, 16
        %s218 = scalar_lea.vmem [#allocation2], %s217
        // Predicated region
        $region33: #{tpu_custom_call.1} parent=31 // pred_check
          %p219 = pneg %p58
        $region34: #{tpu_custom_call.1} parent=31 // pred_check_branch
          %221 = sbr.rel (%p219) target = $region36
        $region35: #{tpu_custom_call.1} parent=31 // pred_region
          %222 = dma.done %s215, 256
        $region36: #{tpu_custom_call.1} parent=31 // pred_fallthru
          _
        %s223 = sand.u32 %s71, 1
        %s224 = scalar_lea.sflag [#allocation6], %s223
        %s225 = sand.u32 %s71, 1
        %s226 = smul.addr %s225, 16
        %s227 = scalar_lea.vmem [#allocation5], %s226
        // Predicated region
        $region37: #{tpu_custom_call.1} parent=31 // pred_check
          %p228 = pneg %p84
        $region38: #{tpu_custom_call.1} parent=31 // pred_check_branch
          %230 = sbr.rel (%p228) target = $region40
        $region39: #{tpu_custom_call.1} parent=31 // pred_region
          %231 = dma.done %s224, 256
        $region40: #{tpu_custom_call.1} parent=31 // pred_fallthru
          _
        %s232 = sand.u32 %s45, 1
        %s233 = scalar_lea.sflag [#allocation3], %s232
        %s234 = sand.u32 %s45, 1
        %s235 = smul.addr %s234, 16
        %s236 = scalar_lea.vmem [#allocation2], %s235
        %p237 = pneg %p58
        %p238 = pneg %p55
        %s239 = sand.u32 %s71, 1
        %s240 = scalar_lea.sflag [#allocation6], %s239
        %s241 = sand.u32 %s71, 1
        %s242 = smul.addr %s241, 16
        %s243 = scalar_lea.vmem [#allocation5], %s242
        %p244 = pneg %p84
        %p245 = pneg %p81
        %p246 = scmp.lt.s32.totalorder %s27, 2
        %s247 = scalar_select %p246, %s27, 2
        %s248 = scalar_lea.vmem %s2, %s247
        %p249 = pneg %p110
        %p250 = pneg %p107
        %p251 = pneg %p138
        %p252 = pneg %p135
        %s253 = sand.u32 %s125, 1
        %s254 = scalar_lea.sflag [#allocation4], %s253
        %s255 = sand.u32 %s125, 1
        %s256 = smul.addr %s255, 8
        %s257 = scalar_lea.vmem [#allocation7], %s256
        %s258 = smul.u32 2, %s28
        %p259 = scmp.lt.s32.totalorder %s27, 2
        %s260 = scalar_select %p259, %s27, 2
        %s261 = scalar_lea.vmem %s2, %s260
        %s262 = smul.u32 2, %s28
        %v264 = vld [vmem:[%s218] sm:$0xff]
        %v265 = vld [vmem:[%s218 + $0x8] sm:$0xff]
        %v266 = vpack.c.bf16 %v265, %v264
        %v267 = vld [vmem:[%s227] sm:$0xf]
        %v268 = vld [vmem:[%s227 + $0x4] sm:$0xf]
        %v269 = vld [vmem:[%s227 + $0x8] sm:$0xf]
        %v270 = vld [vmem:[%s227 + $0xc] sm:$0xf]
        %v271 = vld [vmem:[%s261] sm:$0x1]
        %v273 = vlaneseq
        %v274 = vshrl.u32 %v273, 7
        %v275 = vsub.s32 0, %v274
        %v276 = vrot.slane %v271, %v275
        %v282 = vunpack.c.l.b16 %v267
        %v283 = vunpack.c.l.b16 %v268
        %v284 = vunpack.c.l.b16 %v269
        %v285 = vunpack.c.l.b16 %v270
        %v286 = vpack.c.b16 %v283, %v282
        %v287 = vpack.c.b16 %v285, %v284
        %vm290 = vcmask 261120
        %v292 = vsel %vm290, %v266, 0
        %294 = vmatprep.subr.bf16.mxu0 0
        %295 = vmatpush1.bf16.msra.mxu0 %v286
        %296 = vmatprep.subr.bf16.mxu0 0
        %297 = vmatpush1.bf16.msra.mxu0 %v287
        %298 = vmatprep.subr.bf16.mxu0 0
        %299 = vmatpush1.bf16.msra.mxu0 0
        %300 = vmatprep.subr.bf16.mxu0 0
        %301 = vmatpush1.bf16.msra.mxu0 0
        %302 = vmatprep.subr.bf16.mxu0 0
        %303 = vmatpush1.bf16.msra.mxu0 0
        %304 = vmatprep.subr.bf16.mxu0 0
        %305 = vmatpush1.bf16.msra.mxu0 0
        %306 = vmatprep.subr.bf16.mxu0 0
        %307 = vmatpush1.bf16.msra.mxu0 0
        %308 = vmatprep.subr.bf16.mxu0 0
        %309 = vmatpush1.bf16.msra.mxu0 0
        %310 = vmatprep.subr.bf16.mxu0 0
        %311 = vmatpush1.bf16.msra.mxu0 0
        %312 = vmatprep.subr.bf16.mxu0 0
        %313 = vmatpush1.bf16.msra.mxu0 0
        %314 = vmatprep.subr.bf16.mxu0 0
        %315 = vmatpush1.bf16.msra.mxu0 0
        %316 = vmatprep.subr.bf16.mxu0 0
        %317 = vmatpush1.bf16.msra.mxu0 0
        %318 = vmatprep.subr.bf16.mxu0 0
        %319 = vmatpush1.bf16.msra.mxu0 0
        %320 = vmatprep.subr.bf16.mxu0 0
        %321 = vmatpush1.bf16.msra.mxu0 0
        %322 = vmatprep.subr.bf16.mxu0 0
        %323 = vmatpush1.bf16.msra.mxu0 0
        %324 = vmatprep.subr.bf16.mxu0 0
        %325 = vmatpush1.bf16.msra.mxu0 0
        %326 = vmatprep.mubr.bf16.mxu0 0
        %327 = vmatmul.mubr.bf16.gmra.mrb[0].mxu0 %v292
        %v328 = vpop.f32.mrb[0].mxu0
        %v329 = vadd.f32 %v276, %v328
        %v330 = vpop.f32.mrb[0].mxu0
        %v331 = vpop.f32.mrb[0].mxu0
        %v332 = vadd.f32 %v276, %v331
        %v333 = vpop.f32.mrb[0].mxu0
        %334 = vdwg.mxu0
        %v335 = vpack.c.bf16 %v332, %v329
        %v337 = vunpack.c.l.b16 %v335
        %v338 = vunpack.c.h.b16 %v335
        %v339 = vpack.c.b16 %v337, %v337
        %v340 = vpack.c.b16 %v338, %v338
        %vm343 = vcmask 257024
        %344 = vst.msk [vmem:[%s257] sm:$0xf] %vm343, %v339
        %345 = vst.msk [vmem:[%s257 + $0x4] sm:$0xf] %vm343, %v340
        %s346 = sand.u32 %s125, 1
        %s347 = scalar_lea.sflag [#allocation4], %s346
        %s348 = sand.u32 %s125, 1
        %s349 = smul.addr %s348, 8
        %s350 = scalar_lea.vmem [#allocation7], %s349
        // Predicated region
        $region41: #{tpu_custom_call.1} parent=31 // pred_check
          %p351 = pneg %p135
        $region42: #{tpu_custom_call.1} parent=31 // pred_check_branch
          %353 = sbr.rel (%p351) target = $region44
        $region43: #{tpu_custom_call.1} parent=31 // pred_region
          %s354 = smul.u32 2, %s28
          %s356 = ssub.s32 128, 128
          %357 = vsyncadd %s347, %s356
          %s358 = smul.addr %s27, 2
          %s359 = sadd.s32 %s354, %s358
          %s360 = smul.addr %s359, 64
          %s361 = scalar_lea.hbm %s3, %s360
          %s362 = sshll.u32 %s350, 4
          %s363 = int_to_ptr.vmem [resolvable:$true] %s362
          %368 = dma.vmem_to_hbm [thread:$0]  %s363, 128, %s361, %s347, 64, 64, 4
        $region44: #{tpu_custom_call.1} parent=31 // pred_fallthru
          _
      $region32: #{tpu_custom_call.1} parent=5 // pred_fallthru
        _
      %p369 = scmp.le.s32.totalorder 2, %s18
      // Predicated region
      $region45: #{tpu_custom_call.1} parent=5 // pred_check
        %p370 = pneg %p369
      $region46: #{tpu_custom_call.1} parent=5 // pred_check_branch
        %372 = sbr.rel (%p370) target = $region48
      $region47: #{tpu_custom_call.1} parent=5 // pred_region
        %s373 = ssub.s32 %s18, 2
        // Predicated region
        $region49: #{tpu_custom_call.1} parent=47 // pred_check
          %p374 = pneg %p141
        $region50: #{tpu_custom_call.1} parent=47 // pred_check_branch
          %376 = sbr.rel (%p374) target = $region52
        $region51: #{tpu_custom_call.1} parent=47 // pred_region
          %s377 = sand.u32 %s126, 1
          %s378 = scalar_lea.sflag [#allocation4], %s377
          %s379 = sand.u32 %s126, 1
          %s380 = smul.addr %s379, 8
          %s381 = scalar_lea.vmem [#allocation7], %s380
          %382 = dma.done %s378, 128
        $region52: #{tpu_custom_call.1} parent=47 // pred_fallthru
          _
      $region48: #{tpu_custom_call.1} parent=5 // pred_fallthru
        _
    $region6: #{tpu_custom_call.1} parent=1 // loop_footer
      %s22 = sadd.s32 1, %s18
    $region7: #{tpu_custom_call.1} parent=1 // loop_footer_branch
      %17 = sbr.rel target = $region3
    $region8: #{tpu_custom_call.1} parent=1 // loop_exit
      _
    %383 = vsyncpa [#allocation3], 1
    %s384 = scalar_lea.sflag [#allocation3], 1
    %385 = vsyncpa %s384, 1
    %386 = vsyncpa [#allocation6], 1
    %s387 = scalar_lea.sflag [#allocation6], 1
    %388 = vsyncpa %s387, 1
    %389 = vsyncpa [#allocation4], 1
    %s390 = scalar_lea.sflag [#allocation4], 1
    %391 = vsyncpa %s390, 1

</llo_original>
